<compile_context>
chip_gen: v7x
topology: tpu7x:2x2x1
jax: 0.10.0
libtpu: 0.0.40
codegen_flags: <defaults>
</compile_context>

<pallas_src>
import functools

import jax
import jax.numpy as jnp
from jax.experimental import pallas as pl
from jax.experimental.pallas import tpu as pltpu


def _round_up(n: int, m: int) -> int:
    return ((n + m - 1) // m) * m


# ----------------------------------------------------------------------------
# Fused MLP kernel: y = act_L(... act_1(x @ W1 + b1) ... @ WL + bL)
# refs = (w1, ..., wL, bias_buf, out); intermediates live in vregs.
# ----------------------------------------------------------------------------
def _fused_mlp_kernel(x_ref, *refs, num_layers, bias_offsets, sigmoid_output):
    w_refs = refs[:num_layers]
    b_ref = refs[num_layers]          # (1, sum_slots) f32, 128-aligned slots
    o_ref = refs[num_layers + 1]

    h = x_ref[...].astype(jnp.float32)
    for i in range(num_layers):
        w = w_refs[i][...]                                # (K_i, N_i), f32 or bf16
        n_out = w.shape[1]
        lhs = h if h.dtype == w.dtype else h.astype(w.dtype)
        y = jnp.dot(lhs, w, preferred_element_type=jnp.float32)   # f32 accumulate
        off = bias_offsets[i]
        y = y + b_ref[:, off:off + n_out]                 # f32 bias, (1, N_i) bcast
        if i < num_layers - 1:
            h = jnp.maximum(y, 0.0)                       # hidden ReLU (f32)
        else:
            h = jax.nn.sigmoid(y) if sigmoid_output else y
    o_ref[...] = h.astype(o_ref.dtype)


def fused_mlp_forward(x, weights, bias_buf, *, bias_offsets, num_classes,
                      sigmoid_output, batch_tile=None):
    """x: (B, C, H, W) or (B, K); weights: list of (K_i, N_i) pre-transposed."""
    B = x.shape[0]
    x = x.reshape(B, -1)                                  # nn.Flatten()
    K = x.shape[1]
    num_layers = len(weights)

    kernel = functools.partial(_fused_mlp_kernel,
                               num_layers=num_layers,
                               bias_offsets=bias_offsets,
                               sigmoid_output=sigmoid_output)

    if batch_tile is None or B <= batch_tile:
        # Single launch, grid=(): everything VMEM-resident, no padding/copies.
        vmem = pl.BlockSpec(memory_space=pltpu.MemorySpace.VMEM)
        return pl.pallas_call(
            kernel,
            out_shape=jax.ShapeDtypeStruct((B, num_classes), jnp.float32),
            in_specs=[vmem] * (num_layers + 2),
            out_specs=vmem,
        )(x, *weights, bias_buf)

    # Batch-gridded path for larger B (v7x megacore / pipelined x,out tiles).
    tb = batch_tile
    b_pad = _round_up(B, tb)
    if b_pad != B:
        x = jnp.zeros((b_pad, K), x.dtype).at[:B].set(x)
    w_specs = [pl.BlockSpec(w.shape, lambda i: (0, 0)) for w in weights]
    out = pl.pallas_call(
        kernel,
        out_shape=jax.ShapeDtypeStruct((b_pad, num_classes), jnp.float32),
        grid=(b_pad // tb,),
        in_specs=[pl.BlockSpec((tb, K), lambda i: (i, 0)),
                  *w_specs,
                  pl.BlockSpec(bias_buf.shape, lambda i: (0, 0))],
        out_specs=pl.BlockSpec((tb, num_classes), lambda i: (i, 0)),
        compiler_params=pltpu.CompilerParams(
            dimension_semantics=("parallel",)),
    )(x, *weights, bias_buf)
    return out[:B] if b_pad != B else out


# ----------------------------------------------------------------------------
# Parameter init (nn.Linear-shaped) + one-time repack for the kernel
# ----------------------------------------------------------------------------
def init_mlp_params(key, input_size, hidden_size, num_classes, num_layers):
    """Deterministic init, same shapes as nn.Linear: W (out, in), b (out,)."""
    h = [hidden_size] * (num_layers - 1)
    dims_in = [input_size] + h
    dims_out = h + [num_classes]
    params = []
    for n_in, n_out in zip(dims_in, dims_out):
        key, kw, kb = jax.random.split(key, 3)
        bound = 1.0 / (n_in ** 0.5)
        w = jax.random.uniform(kw, (n_out, n_in), jnp.float32, -bound, bound)
        b = jax.random.uniform(kb, (n_out,), jnp.float32, -bound, bound)
        params.append((w, b))
    return params


def prepare_pallas_params(params, weight_dtype=jnp.float32):
    """One-time repack (outside the forward path):
      * each nn.Linear W (out, in) -> transposed (in, out), optionally stored
        bf16 (halves the dominant W1 HBM->VMEM DMA; accumulation stays f32),
      * NO zero padding of weight dims in HBM,
      * all biases concatenated into a single f32 (1, sum_slots) buffer with
        128-aligned per-layer offsets (one DMA descriptor instead of L)."""
    weights = []
    bias_offsets = []
    off = 0
    for w, _ in params:
        n_out, _n_in = w.shape
        weights.append(jnp.asarray(w.T, dtype=weight_dtype))
        bias_offsets.append(off)
        off += _round_up(n_out, 128)
    bias_buf = jnp.zeros((1, off), jnp.float32)
    for (_, b), o in zip(params, bias_offsets):
        bias_buf = bias_buf.at[0, o:o + b.shape[0]].set(b)
    return weights, bias_buf, tuple(bias_offsets)


# ----------------------------------------------------------------------------
# Pure-JAX reference matching the PyTorch forward exactly
# ----------------------------------------------------------------------------
def mlp_classification_ref(x_nchw, params, sigmoid_output):
    num_layers = len(params)
    B = x_nchw.shape[0]
    x = x_nchw.reshape(B, -1)
    for i, (w, b) in enumerate(params):
        x = x @ w.T + b
        if i < num_layers - 1:
            x = jnp.maximum(x, 0.0)
    if sigmoid_output:
        x = jax.nn.sigmoid(x)
    return x


if __name__ == "__main__":
    # MLPClassificationConfig(hidden_size=32, num_classes=10,
    #                         input_size=4*16*16, num_layers=3,
    #                         sigmoid_output=True)
    B, C, H, W = 2, 4, 16, 16
    hidden_size = 32
    num_classes = 10
    input_size = C * H * W          # 1024
    num_layers = 3
    sigmoid_output = True

    key = jax.random.PRNGKey(0)
    key, kx = jax.random.split(key)
    x = jax.random.normal(kx, (B, C, H, W), jnp.float32)

    params = init_mlp_params(key, input_size, hidden_size,
                             num_classes, num_layers)
    ref = mlp_classification_ref(x, params, sigmoid_output)

    # 1) f32 weights, single launch (grid=()), tight reference check.
    w_f32, bias_buf, bias_offsets = prepare_pallas_params(params, jnp.float32)
    fwd_f32 = jax.jit(functools.partial(
        fused_mlp_forward, bias_offsets=bias_offsets,
        num_classes=num_classes, sigmoid_output=sigmoid_output))
    out_f32 = jax.block_until_ready(fwd_f32(x, w_f32, bias_buf))
    assert out_f32.shape == (B, num_classes)
    assert jnp.allclose(out_f32, ref, atol=1e-5, rtol=1e-5), "f32 path mismatch"

    # 2) bf16-stored weights (half the dominant weight DMA), f32 accumulate.
    #    Expected abs error ~1e-3 pre-sigmoid from bf16 operand rounding.
    w_bf16, _, _ = prepare_pallas_params(params, jnp.bfloat16)
    fwd_bf16 = jax.jit(functools.partial(
        fused_mlp_forward, bias_offsets=bias_offsets,
        num_classes=num_classes, sigmoid_output=sigmoid_output))
    out_bf16 = jax.block_until_ready(fwd_bf16(x, w_bf16, bias_buf))
    assert out_bf16.shape == (B, num_classes)
    assert jnp.allclose(out_bf16, ref, atol=2e-2, rtol=2e-2), "bf16 path mismatch"

    # 3) Batch-gridded configuration (the one to use when scaling B / on v7x).
    B2 = 64
    key, kx2 = jax.random.split(key)
    x2 = jax.random.normal(kx2, (B2, C, H, W), jnp.float32)
    ref2 = mlp_classification_ref(x2, params, sigmoid_output)
    fwd_grid = jax.jit(functools.partial(
        fused_mlp_forward, bias_offsets=bias_offsets,
        num_classes=num_classes, sigmoid_output=sigmoid_output,
        batch_tile=32))
    out_grid = jax.block_until_ready(fwd_grid(x2, w_f32, bias_buf))
    assert out_grid.shape == (B2, num_classes)
    assert jnp.allclose(out_grid, ref2, atol=1e-5, rtol=1e-5), "gridded path mismatch"

    print("KERNEL_OK")
</pallas_src>

<mosaic_0001>
module attributes {stable_mosaic.version = 11 : i64} {
  func.func @_fused_mlp_kernel(%arg0: memref<2x1024xf32, #tpu.memory_space<vmem>>, %arg1: memref<1024x32xf32, #tpu.memory_space<vmem>>, %arg2: memref<32x32xf32, #tpu.memory_space<vmem>>, %arg3: memref<32x10xf32, #tpu.memory_space<vmem>>, %arg4: memref<1x384xf32, #tpu.memory_space<vmem>>, %arg5: memref<2x10xf32, #tpu.memory_space<vmem>>) attributes {dimension_semantics = [], scalar_prefetch = 0 : i64, scratch_operands = 0 : i64, tpu.core_type = #tpu.core_type<tc>} {
    %c0 = arith.constant 0 : index
    %c0_0 = arith.constant 0 : index
    %0 = vector.load %arg0[%c0, %c0_0] : memref<2x1024xf32, #tpu.memory_space<vmem>>, vector<2x1024xf32>
    %c0_1 = arith.constant 0 : index
    %c0_2 = arith.constant 0 : index
    %1 = vector.load %arg1[%c0_1, %c0_2] : memref<1024x32xf32, #tpu.memory_space<vmem>>, vector<1024x32xf32>
    %cst = arith.constant dense<0.000000e+00> : vector<2x32xf32>
    %2 = tpu.matmul %0, %1, %cst {dimension_numbers = #tpu.dot_dimension_numbers<[1], [0], [0], [1], [0, 0, 1, 1], [], []>} : vector<2x1024xf32>, vector<1024x32xf32>, vector<2x32xf32> -> vector<2x32xf32>
    %c0_3 = arith.constant 0 : index
    %c0_4 = arith.constant 0 : index
    %3 = vector.load %arg4[%c0_3, %c0_4] : memref<1x384xf32, #tpu.memory_space<vmem>>, vector<1x32xf32>
    %4 = vector.broadcast %3 : vector<1x32xf32> to vector<2x32xf32>
    %5 = arith.addf %2, %4 : vector<2x32xf32>
    %cst_5 = arith.constant 0.000000e+00 : f32
    %6 = vector.broadcast %cst_5 : f32 to vector<2x32xf32>
    %7 = arith.maximumf %5, %6 : vector<2x32xf32>
    %c0_6 = arith.constant 0 : index
    %c0_7 = arith.constant 0 : index
    %8 = vector.load %arg2[%c0_6, %c0_7] : memref<32x32xf32, #tpu.memory_space<vmem>>, vector<32x32xf32>
    %cst_8 = arith.constant dense<0.000000e+00> : vector<2x32xf32>
    %9 = tpu.matmul %7, %8, %cst_8 {dimension_numbers = #tpu.dot_dimension_numbers<[1], [0], [0], [1], [0, 0, 1, 1], [], []>} : vector<2x32xf32>, vector<32x32xf32>, vector<2x32xf32> -> vector<2x32xf32>
    %c0_9 = arith.constant 0 : index
    %c128 = arith.constant 128 : index
    %10 = vector.load %arg4[%c0_9, %c128] : memref<1x384xf32, #tpu.memory_space<vmem>>, vector<1x32xf32>
    %11 = vector.broadcast %10 : vector<1x32xf32> to vector<2x32xf32>
    %12 = arith.addf %9, %11 : vector<2x32xf32>
    %cst_10 = arith.constant 0.000000e+00 : f32
    %13 = vector.broadcast %cst_10 : f32 to vector<2x32xf32>
    %14 = arith.maximumf %12, %13 : vector<2x32xf32>
    %c0_11 = arith.constant 0 : index
    %c0_12 = arith.constant 0 : index
    %15 = vector.load %arg3[%c0_11, %c0_12] : memref<32x10xf32, #tpu.memory_space<vmem>>, vector<32x10xf32>
    %cst_13 = arith.constant dense<0.000000e+00> : vector<2x10xf32>
    %16 = tpu.matmul %14, %15, %cst_13 {dimension_numbers = #tpu.dot_dimension_numbers<[1], [0], [0], [1], [0, 0, 1, 1], [], []>} : vector<2x32xf32>, vector<32x10xf32>, vector<2x10xf32> -> vector<2x10xf32>
    %c0_14 = arith.constant 0 : index
    %c256 = arith.constant 256 : index
    %17 = vector.load %arg4[%c0_14, %c256] : memref<1x384xf32, #tpu.memory_space<vmem>>, vector<1x10xf32>
    %18 = vector.broadcast %17 : vector<1x10xf32> to vector<2x10xf32>
    %19 = arith.addf %16, %18 : vector<2x10xf32>
    %20 = arith.negf %19 : vector<2x10xf32>
    %21 = math.exp %20 : vector<2x10xf32>
    %cst_15 = arith.constant 1.000000e+00 : f32
    %22 = vector.broadcast %cst_15 : f32 to vector<2x10xf32>
    %23 = arith.addf %22, %21 : vector<2x10xf32>
    %24 = arith.divf %22, %23 : vector<2x10xf32>
    %c0_16 = arith.constant 0 : index
    %c0_17 = arith.constant 0 : index
    %25 = vector.load %arg5[%c0_16, %c0_17] : memref<2x10xf32, #tpu.memory_space<vmem>>, vector<2x10xf32>
    tpu.vector_store %arg5[%c0_16, %c0_17], %24 {strides = array<i32>} : memref<2x10xf32, #tpu.memory_space<vmem>>, vector<2x10xf32>,
    return
  }
}

</mosaic_0001>

<llo_original>
// kernel: fused_mlp_forward.1
$region0: #{fused_mlp_forward.1}
  #allocation0 [shape = 'u32[]', space=smem, size = 0x4, offset = 0x4, fixed_abs, tag = 'smem constant byte address 0x4 - core index']
  #allocation1 [shape = 'u32[144,128]{1,0:T(1,128)}', space=vmem, size = 0x12000, scoped, tag = 'internal scratch']
  %s0 = inlined_call_operand.vmem [shape: f32[2,1024], index: 0, kind: input, shape index: {}]
  %s1 = inlined_call_operand.vmem [shape: f32[1024,32], index: 1, kind: input, shape index: {}]
  %s2 = inlined_call_operand.vmem [shape: f32[32,32], index: 2, kind: input, shape index: {}]
  %s3 = inlined_call_operand.vmem [shape: f32[32,10], index: 3, kind: input, shape index: {}]
  %s4 = inlined_call_operand.vmem [shape: f32[1,384], index: 4, kind: input, shape index: {}]
  %s5 = inlined_call_operand.hbm [shape: f32[2,10], index: 5, kind: output, shape index: {}]
  %s6 = sld [smem:[#allocation0]]
  $region30: #{fused_mlp_forward.1} parent=0
    _
  %s8 = ssub.s32 1, %s6
  %s9 = scalar_select 0, %s8, %s6
  $region1: #{fused_mlp_forward.1} parent=0
    #allocation2 [shape = 'u8[1024]{0}', space=vmem, size = 0x400, scoped, tag = 'output window, operand 0, single buffered']
    #allocation3 [shape = 's32[1]{0}', space=sflag, size = 0x4, scoped, tag = 'scoped memory for fused_mlp_forward.1']
    %10 = vsyncpa [#allocation3], 0
    // Predicated region
    $region2: #{fused_mlp_forward.1} parent=1 // pred_check
      _
    $region3: #{fused_mlp_forward.1} parent=1 // pred_check_branch
      %12 = sbr.rel (0) target = $region5
    $region4: #{fused_mlp_forward.1} parent=1 // pred_region
      _
    $region5: #{fused_mlp_forward.1} parent=1 // pred_fallthru
      _
    // Predicated region
    $region6: #{fused_mlp_forward.1} parent=1 // pred_check
      _
    $region7: #{fused_mlp_forward.1} parent=1 // pred_check_branch
      %14 = sbr.rel (0) target = $region9
    $region8: #{fused_mlp_forward.1} parent=1 // pred_region
      _
    $region9: #{fused_mlp_forward.1} parent=1 // pred_fallthru
      _
    // Predicated region
    $region10: #{fused_mlp_forward.1} parent=1 // pred_check
      _
    $region11: #{fused_mlp_forward.1} parent=1 // pred_check_branch
      %16 = sbr.rel (0) target = $region13
    $region12: #{fused_mlp_forward.1} parent=1 // pred_region
      _
    $region13: #{fused_mlp_forward.1} parent=1 // pred_fallthru
      _
    // Predicated region
    $region14: #{fused_mlp_forward.1} parent=1 // pred_check
      _
    $region15: #{fused_mlp_forward.1} parent=1 // pred_check_branch
      %18 = sbr.rel (0) target = $region17
    $region16: #{fused_mlp_forward.1} parent=1 // pred_region
      _
    $region17: #{fused_mlp_forward.1} parent=1 // pred_fallthru
      _
    // Predicated region
    $region18: #{fused_mlp_forward.1} parent=1 // pred_check
      _
    $region19: #{fused_mlp_forward.1} parent=1 // pred_check_branch
      %20 = sbr.rel (0) target = $region21
    $region20: #{fused_mlp_forward.1} parent=1 // pred_region
      _
    $region21: #{fused_mlp_forward.1} parent=1 // pred_fallthru
      _
    %v21 = vld [vmem:[%s0] sm:$0xff]
    %v22 = vld [vmem:[%s0 + $0x8] sm:$0xff]
    %v23 = vld [vmem:[%s1] sm:$0xff]
    %v24 = vld [vmem:[%s1 + $0x8] sm:$0xff]
    %v25 = vld [vmem:[%s1 + $0x10] sm:$0xff]
    %v26 = vld [vmem:[%s1 + $0x18] sm:$0xff]
    %v27 = vld [vmem:[%s1 + $0x20] sm:$0xff]
    %v28 = vld [vmem:[%s1 + $0x28] sm:$0xff]
    %v29 = vld [vmem:[%s1 + $0x30] sm:$0xff]
    %v30 = vld [vmem:[%s1 + $0x38] sm:$0xff]
    %v31 = vld [vmem:[%s1 + $0x40] sm:$0xff]
    %v32 = vld [vmem:[%s1 + $0x48] sm:$0xff]
    %v33 = vld [vmem:[%s1 + $0x50] sm:$0xff]
    %v34 = vld [vmem:[%s1 + $0x58] sm:$0xff]
    %v35 = vld [vmem:[%s1 + $0x60] sm:$0xff]
    %v36 = vld [vmem:[%s1 + $0x68] sm:$0xff]
    %v37 = vld [vmem:[%s1 + $0x70] sm:$0xff]
    %v38 = vld [vmem:[%s1 + $0x78] sm:$0xff]
    %v39 = vld [vmem:[%s1 + $0x80] sm:$0xff]
    %v40 = vld [vmem:[%s1 + $0x88] sm:$0xff]
    %v41 = vld [vmem:[%s1 + $0x90] sm:$0xff]
    %v42 = vld [vmem:[%s1 + $0x98] sm:$0xff]
    %v43 = vld [vmem:[%s1 + $0xa0] sm:$0xff]
    %v44 = vld [vmem:[%s1 + $0xa8] sm:$0xff]
    %v45 = vld [vmem:[%s1 + $0xb0] sm:$0xff]
    %v46 = vld [vmem:[%s1 + $0xb8] sm:$0xff]
    %v47 = vld [vmem:[%s1 + $0xc0] sm:$0xff]
    %v48 = vld [vmem:[%s1 + $0xc8] sm:$0xff]
    %v49 = vld [vmem:[%s1 + $0xd0] sm:$0xff]
    %v50 = vld [vmem:[%s1 + $0xd8] sm:$0xff]
    %v51 = vld [vmem:[%s1 + $0xe0] sm:$0xff]
    %v52 = vld [vmem:[%s1 + $0xe8] sm:$0xff]
    %v53 = vld [vmem:[%s1 + $0xf0] sm:$0xff]
    %v54 = vld [vmem:[%s1 + $0xf8] sm:$0xff]
    %v55 = vld [vmem:[%s1 + $0x100] sm:$0xff]
    %v56 = vld [vmem:[%s1 + $0x108] sm:$0xff]
    %v57 = vld [vmem:[%s1 + $0x110] sm:$0xff]
    %v58 = vld [vmem:[%s1 + $0x118] sm:$0xff]
    %v59 = vld [vmem:[%s1 + $0x120] sm:$0xff]
    %v60 = vld [vmem:[%s1 + $0x128] sm:$0xff]
    %v61 = vld [vmem:[%s1 + $0x130] sm:$0xff]
    %v62 = vld [vmem:[%s1 + $0x138] sm:$0xff]
    %v63 = vld [vmem:[%s1 + $0x140] sm:$0xff]
    %v64 = vld [vmem:[%s1 + $0x148] sm:$0xff]
    %v65 = vld [vmem:[%s1 + $0x150] sm:$0xff]
    %v66 = vld [vmem:[%s1 + $0x158] sm:$0xff]
    %v67 = vld [vmem:[%s1 + $0x160] sm:$0xff]
    %v68 = vld [vmem:[%s1 + $0x168] sm:$0xff]
    %v69 = vld [vmem:[%s1 + $0x170] sm:$0xff]
    %v70 = vld [vmem:[%s1 + $0x178] sm:$0xff]
    %v71 = vld [vmem:[%s1 + $0x180] sm:$0xff]
    %v72 = vld [vmem:[%s1 + $0x188] sm:$0xff]
    %v73 = vld [vmem:[%s1 + $0x190] sm:$0xff]
    %v74 = vld [vmem:[%s1 + $0x198] sm:$0xff]
    %v75 = vld [vmem:[%s1 + $0x1a0] sm:$0xff]
    %v76 = vld [vmem:[%s1 + $0x1a8] sm:$0xff]
    %v77 = vld [vmem:[%s1 + $0x1b0] sm:$0xff]
    %v78 = vld [vmem:[%s1 + $0x1b8] sm:$0xff]
    %v79 = vld [vmem:[%s1 + $0x1c0] sm:$0xff]
    %v80 = vld [vmem:[%s1 + $0x1c8] sm:$0xff]
    %v81 = vld [vmem:[%s1 + $0x1d0] sm:$0xff]
    %v82 = vld [vmem:[%s1 + $0x1d8] sm:$0xff]
    %v83 = vld [vmem:[%s1 + $0x1e0] sm:$0xff]
    %v84 = vld [vmem:[%s1 + $0x1e8] sm:$0xff]
    %v85 = vld [vmem:[%s1 + $0x1f0] sm:$0xff]
    %v86 = vld [vmem:[%s1 + $0x1f8] sm:$0xff]
    %v87 = vld [vmem:[%s1 + $0x200] sm:$0xff]
    %v88 = vld [vmem:[%s1 + $0x208] sm:$0xff]
    %v89 = vld [vmem:[%s1 + $0x210] sm:$0xff]
    %v90 = vld [vmem:[%s1 + $0x218] sm:$0xff]
    %v91 = vld [vmem:[%s1 + $0x220] sm:$0xff]
    %v92 = vld [vmem:[%s1 + $0x228] sm:$0xff]
    %v93 = vld [vmem:[%s1 + $0x230] sm:$0xff]
    %v94 = vld [vmem:[%s1 + $0x238] sm:$0xff]
    %v95 = vld [vmem:[%s1 + $0x240] sm:$0xff]
    %v96 = vld [vmem:[%s1 + $0x248] sm:$0xff]
    %v97 = vld [vmem:[%s1 + $0x250] sm:$0xff]
    %v98 = vld [vmem:[%s1 + $0x258] sm:$0xff]
    %v99 = vld [vmem:[%s1 + $0x260] sm:$0xff]
    %v100 = vld [vmem:[%s1 + $0x268] sm:$0xff]
    %v101 = vld [vmem:[%s1 + $0x270] sm:$0xff]
    %v102 = vld [vmem:[%s1 + $0x278] sm:$0xff]
    %v103 = vld [vmem:[%s1 + $0x280] sm:$0xff]
    %v104 = vld [vmem:[%s1 + $0x288] sm:$0xff]
    %v105 = vld [vmem:[%s1 + $0x290] sm:$0xff]
    %v106 = vld [vmem:[%s1 + $0x298] sm:$0xff]
    %v107 = vld [vmem:[%s1 + $0x2a0] sm:$0xff]
    %v108 = vld [vmem:[%s1 + $0x2a8] sm:$0xff]
    %v109 = vld [vmem:[%s1 + $0x2b0] sm:$0xff]
    %v110 = vld [vmem:[%s1 + $0x2b8] sm:$0xff]
    %v111 = vld [vmem:[%s1 + $0x2c0] sm:$0xff]
    %v112 = vld [vmem:[%s1 + $0x2c8] sm:$0xff]
    %v113 = vld [vmem:[%s1 + $0x2d0] sm:$0xff]
    %v114 = vld [vmem:[%s1 + $0x2d8] sm:$0xff]
    %v115 = vld [vmem:[%s1 + $0x2e0] sm:$0xff]
    %v116 = vld [vmem:[%s1 + $0x2e8] sm:$0xff]
    %v117 = vld [vmem:[%s1 + $0x2f0] sm:$0xff]
    %v118 = vld [vmem:[%s1 + $0x2f8] sm:$0xff]
    %v119 = vld [vmem:[%s1 + $0x300] sm:$0xff]
    %v120 = vld [vmem:[%s1 + $0x308] sm:$0xff]
    %v121 = vld [vmem:[%s1 + $0x310] sm:$0xff]
    %v122 = vld [vmem:[%s1 + $0x318] sm:$0xff]
    %v123 = vld [vmem:[%s1 + $0x320] sm:$0xff]
    %v124 = vld [vmem:[%s1 + $0x328] sm:$0xff]
    %v125 = vld [vmem:[%s1 + $0x330] sm:$0xff]
    %v126 = vld [vmem:[%s1 + $0x338] sm:$0xff]
    %v127 = vld [vmem:[%s1 + $0x340] sm:$0xff]
    %v128 = vld [vmem:[%s1 + $0x348] sm:$0xff]
    %v129 = vld [vmem:[%s1 + $0x350] sm:$0xff]
    %v130 = vld [vmem:[%s1 + $0x358] sm:$0xff]
    %v131 = vld [vmem:[%s1 + $0x360] sm:$0xff]
    %v132 = vld [vmem:[%s1 + $0x368] sm:$0xff]
    %v133 = vld [vmem:[%s1 + $0x370] sm:$0xff]
    %v134 = vld [vmem:[%s1 + $0x378] sm:$0xff]
    %v135 = vld [vmem:[%s1 + $0x380] sm:$0xff]
    %v136 = vld [vmem:[%s1 + $0x388] sm:$0xff]
    %v137 = vld [vmem:[%s1 + $0x390] sm:$0xff]
    %v138 = vld [vmem:[%s1 + $0x398] sm:$0xff]
    %v139 = vld [vmem:[%s1 + $0x3a0] sm:$0xff]
    %v140 = vld [vmem:[%s1 + $0x3a8] sm:$0xff]
    %v141 = vld [vmem:[%s1 + $0x3b0] sm:$0xff]
    %v142 = vld [vmem:[%s1 + $0x3b8] sm:$0xff]
    %v143 = vld [vmem:[%s1 + $0x3c0] sm:$0xff]
    %v144 = vld [vmem:[%s1 + $0x3c8] sm:$0xff]
    %v145 = vld [vmem:[%s1 + $0x3d0] sm:$0xff]
    %v146 = vld [vmem:[%s1 + $0x3d8] sm:$0xff]
    %v147 = vld [vmem:[%s1 + $0x3e0] sm:$0xff]
    %v148 = vld [vmem:[%s1 + $0x3e8] sm:$0xff]
    %v149 = vld [vmem:[%s1 + $0x3f0] sm:$0xff]
    %v150 = vld [vmem:[%s1 + $0x3f8] sm:$0xff]
    %v151 = vld [vmem:[%s4] sm:$0x1]
    %v153 = vlaneseq
    %v154 = vshrl.u32 %v153, 7
    %v155 = vsub.s32 0, %v154
    %v156 = vrot.slane %v151, %v155
    %v160 = vcombine.high %v21, %v21
    %v162 = vunpack.c.l.s4 1983009808
    %v163 = vunpack.c.0.s8 %v162
    %v164 = vlaneseq
    %v165 = vshrl.u32 %v164, 7
    %v166 = vsub.s32 %v163, %v165
    %v167 = vrot.slane %v21, %v166
    %v169 = vunpack.c.l.s4 1983009808
    %v170 = vunpack.c.0.s8 %v169
    %v171 = vlaneseq
    %v172 = vshrl.u32 %v171, 7
    %v173 = vsub.s32 %v170, %v172
    %v174 = vrot.slane %v160, %v173
    %v175 = vcombine.high %v167, %v167
    %v176 = vcombine.high %v174, %v174
    %v177 = vcombine.high %v22, %v22
    %v179 = vunpack.c.l.s4 1983009808
    %v180 = vunpack.c.0.s8 %v179
    %v181 = vlaneseq
    %v182 = vshrl.u32 %v181, 7
    %v183 = vsub.s32 %v180, %v182
    %v184 = vrot.slane %v22, %v183
    %v186 = vunpack.c.l.s4 1983009808
    %v187 = vunpack.c.0.s8 %v186
    %v188 = vlaneseq
    %v189 = vshrl.u32 %v188, 7
    %v190 = vsub.s32 %v187, %v189
    %v191 = vrot.slane %v177, %v190
    %v192 = vcombine.high %v184, %v184
    %v193 = vcombine.high %v191, %v191
    %202 = vmatprep.subr.mxu0 0.0
    %203 = vmatpush1.msra.mxu0 %v23
    %204 = vmatprep.subr.mxu0 0.0
    %205 = vmatpush1.msra.mxu0 %v24
    %206 = vmatprep.subr.mxu0 0.0
    %207 = vmatpush1.msra.mxu0 %v25
    %208 = vmatprep.subr.mxu0 0.0
    %209 = vmatpush1.msra.mxu0 %v26
    %210 = vmatprep.subr.mxu0 0.0
    %211 = vmatpush1.msra.mxu0 %v27
    %212 = vmatprep.subr.mxu0 0.0
    %213 = vmatpush1.msra.mxu0 %v28
    %214 = vmatprep.subr.mxu0 0.0
    %215 = vmatpush1.msra.mxu0 %v29
    %216 = vmatprep.subr.mxu0 0.0
    %217 = vmatpush1.msra.mxu0 %v30
    %218 = vmatprep.subr.mxu0 0.0
    %219 = vmatpush1.msra.mxu0 %v31
    %220 = vmatprep.subr.mxu0 0.0
    %221 = vmatpush1.msra.mxu0 %v32
    %222 = vmatprep.subr.mxu0 0.0
    %223 = vmatpush1.msra.mxu0 %v33
    %224 = vmatprep.subr.mxu0 0.0
    %225 = vmatpush1.msra.mxu0 %v34
    %226 = vmatprep.subr.mxu0 0.0
    %227 = vmatpush1.msra.mxu0 %v35
    %228 = vmatprep.subr.mxu0 0.0
    %229 = vmatpush1.msra.mxu0 %v36
    %230 = vmatprep.subr.mxu0 0.0
    %231 = vmatpush1.msra.mxu0 %v37
    %232 = vmatprep.subr.mxu0 0.0
    %233 = vmatpush1.msra.mxu0 %v38
    %234 = vmatprep.subr.mxu0 0.0
    %235 = vmatpush1.msra.mxu0 %v39
    %236 = vmatprep.subr.mxu0 0.0
    %237 = vmatpush1.msra.mxu0 %v40
    %238 = vmatprep.subr.mxu0 0.0
    %239 = vmatpush1.msra.mxu0 %v41
    %240 = vmatprep.subr.mxu0 0.0
    %241 = vmatpush1.msra.mxu0 %v42
    %242 = vmatprep.subr.mxu0 0.0
    %243 = vmatpush1.msra.mxu0 %v43
    %244 = vmatprep.subr.mxu0 0.0
    %245 = vmatpush1.msra.mxu0 %v44
    %246 = vmatprep.subr.mxu0 0.0
    %247 = vmatpush1.msra.mxu0 %v45
    %248 = vmatprep.subr.mxu0 0.0
    %249 = vmatpush1.msra.mxu0 %v46
    %250 = vmatprep.subr.mxu0 0.0
    %251 = vmatpush1.msra.mxu0 %v47
    %252 = vmatprep.subr.mxu0 0.0
    %253 = vmatpush1.msra.mxu0 %v48
    %254 = vmatprep.subr.mxu0 0.0
    %255 = vmatpush1.msra.mxu0 %v49
    %256 = vmatprep.subr.mxu0 0.0
    %257 = vmatpush1.msra.mxu0 %v50
    %258 = vmatprep.subr.mxu0 0.0
    %259 = vmatpush1.msra.mxu0 %v51
    %260 = vmatprep.subr.mxu0 0.0
    %261 = vmatpush1.msra.mxu0 %v52
    %262 = vmatprep.subr.mxu0 0.0
    %263 = vmatpush1.msra.mxu0 %v53
    %264 = vmatprep.subr.mxu0 0.0
    %265 = vmatpush1.msra.mxu0 %v54
    %266 = vmatprep.mubr.f32.mxu0 %v175
    %267 = vmatmul.mubr.f32.gmra.mrb[0].mxu0 %v167
    %v268 = vpop.f32.mrb[0].mxu0
    %v269 = vadd.f32 %v156, %v268
    %v270 = vpop.f32.mrb[0].mxu0
    %271 = vdwg.mxu0
    %272 = vmatprep.subr.mxu0 0.0
    %273 = vmatpush1.msra.mxu0 %v55
    %274 = vmatprep.subr.mxu0 0.0
    %275 = vmatpush1.msra.mxu0 %v56
    %276 = vmatprep.subr.mxu0 0.0
    %277 = vmatpush1.msra.mxu0 %v57
    %278 = vmatprep.subr.mxu0 0.0
    %279 = vmatpush1.msra.mxu0 %v58
    %280 = vmatprep.subr.mxu0 0.0
    %281 = vmatpush1.msra.mxu0 %v59
    %282 = vmatprep.subr.mxu0 0.0
    %283 = vmatpush1.msra.mxu0 %v60
    %284 = vmatprep.subr.mxu0 0.0
    %285 = vmatpush1.msra.mxu0 %v61
    %286 = vmatprep.subr.mxu0 0.0
    %287 = vmatpush1.msra.mxu0 %v62
    %288 = vmatprep.subr.mxu0 0.0
    %289 = vmatpush1.msra.mxu0 %v63
    %290 = vmatprep.subr.mxu0 0.0
    %291 = vmatpush1.msra.mxu0 %v64
    %292 = vmatprep.subr.mxu0 0.0
    %293 = vmatpush1.msra.mxu0 %v65
    %294 = vmatprep.subr.mxu0 0.0
    %295 = vmatpush1.msra.mxu0 %v66
    %296 = vmatprep.subr.mxu0 0.0
    %297 = vmatpush1.msra.mxu0 %v67
    %298 = vmatprep.subr.mxu0 0.0
    %299 = vmatpush1.msra.mxu0 %v68
    %300 = vmatprep.subr.mxu0 0.0
    %301 = vmatpush1.msra.mxu0 %v69
    %302 = vmatprep.subr.mxu0 0.0
    %303 = vmatpush1.msra.mxu0 %v70
    %304 = vmatprep.subr.mxu0 0.0
    %305 = vmatpush1.msra.mxu0 %v71
    %306 = vmatprep.subr.mxu0 0.0
    %307 = vmatpush1.msra.mxu0 %v72
    %308 = vmatprep.subr.mxu0 0.0
    %309 = vmatpush1.msra.mxu0 %v73
    %310 = vmatprep.subr.mxu0 0.0
    %311 = vmatpush1.msra.mxu0 %v74
    %312 = vmatprep.subr.mxu0 0.0
    %313 = vmatpush1.msra.mxu0 %v75
    %314 = vmatprep.subr.mxu0 0.0
    %315 = vmatpush1.msra.mxu0 %v76
    %316 = vmatprep.subr.mxu0 0.0
    %317 = vmatpush1.msra.mxu0 %v77
    %318 = vmatprep.subr.mxu0 0.0
    %319 = vmatpush1.msra.mxu0 %v78
    %320 = vmatprep.subr.mxu0 0.0
    %321 = vmatpush1.msra.mxu0 %v79
    %322 = vmatprep.subr.mxu0 0.0
    %323 = vmatpush1.msra.mxu0 %v80
    %324 = vmatprep.subr.mxu0 0.0
    %325 = vmatpush1.msra.mxu0 %v81
    %326 = vmatprep.subr.mxu0 0.0
    %327 = vmatpush1.msra.mxu0 %v82
    %328 = vmatprep.subr.mxu0 0.0
    %329 = vmatpush1.msra.mxu0 %v83
    %330 = vmatprep.subr.mxu0 0.0
    %331 = vmatpush1.msra.mxu0 %v84
    %332 = vmatprep.subr.mxu0 0.0
    %333 = vmatpush1.msra.mxu0 %v85
    %334 = vmatprep.subr.mxu0 0.0
    %335 = vmatpush1.msra.mxu0 %v86
    %336 = vmatprep.mubr.f32.mxu0 %v176
    %337 = vmatmul.mubr.f32.gmra.mrb[0].mxu0 %v174
    %v338 = vpop.f32.mrb[0].mxu0
    %v339 = vadd.f32 %v269, %v338
    %v340 = vpop.f32.mrb[0].mxu0
    %341 = vdwg.mxu0
    %342 = vmatprep.subr.mxu0 0.0
    %343 = vmatpush1.msra.mxu0 %v87
    %344 = vmatprep.subr.mxu0 0.0
    %345 = vmatpush1.msra.mxu0 %v88
    %346 = vmatprep.subr.mxu0 0.0
    %347 = vmatpush1.msra.mxu0 %v89
    %348 = vmatprep.subr.mxu0 0.0
    %349 = vmatpush1.msra.mxu0 %v90
    %350 = vmatprep.subr.mxu0 0.0
    %351 = vmatpush1.msra.mxu0 %v91
    %352 = vmatprep.subr.mxu0 0.0
    %353 = vmatpush1.msra.mxu0 %v92
    %354 = vmatprep.subr.mxu0 0.0
    %355 = vmatpush1.msra.mxu0 %v93
    %356 = vmatprep.subr.mxu0 0.0
    %357 = vmatpush1.msra.mxu0 %v94
    %358 = vmatprep.subr.mxu0 0.0
    %359 = vmatpush1.msra.mxu0 %v95
    %360 = vmatprep.subr.mxu0 0.0
    %361 = vmatpush1.msra.mxu0 %v96
    %362 = vmatprep.subr.mxu0 0.0
    %363 = vmatpush1.msra.mxu0 %v97
    %364 = vmatprep.subr.mxu0 0.0
    %365 = vmatpush1.msra.mxu0 %v98
    %366 = vmatprep.subr.mxu0 0.0
    %367 = vmatpush1.msra.mxu0 %v99
    %368 = vmatprep.subr.mxu0 0.0
    %369 = vmatpush1.msra.mxu0 %v100
    %370 = vmatprep.subr.mxu0 0.0
    %371 = vmatpush1.msra.mxu0 %v101
    %372 = vmatprep.subr.mxu0 0.0
    %373 = vmatpush1.msra.mxu0 %v102
    %374 = vmatprep.subr.mxu0 0.0
    %375 = vmatpush1.msra.mxu0 %v103
    %376 = vmatprep.subr.mxu0 0.0
    %377 = vmatpush1.msra.mxu0 %v104
    %378 = vmatprep.subr.mxu0 0.0
    %379 = vmatpush1.msra.mxu0 %v105
    %380 = vmatprep.subr.mxu0 0.0
    %381 = vmatpush1.msra.mxu0 %v106
    %382 = vmatprep.subr.mxu0 0.0
    %383 = vmatpush1.msra.mxu0 %v107
    %384 = vmatprep.subr.mxu0 0.0
    %385 = vmatpush1.msra.mxu0 %v108
    %386 = vmatprep.subr.mxu0 0.0
    %387 = vmatpush1.msra.mxu0 %v109
    %388 = vmatprep.subr.mxu0 0.0
    %389 = vmatpush1.msra.mxu0 %v110
    %390 = vmatprep.subr.mxu0 0.0
    %391 = vmatpush1.msra.mxu0 %v111
    %392 = vmatprep.subr.mxu0 0.0
    %393 = vmatpush1.msra.mxu0 %v112
    %394 = vmatprep.subr.mxu0 0.0
    %395 = vmatpush1.msra.mxu0 %v113
    %396 = vmatprep.subr.mxu0 0.0
    %397 = vmatpush1.msra.mxu0 %v114
    %398 = vmatprep.subr.mxu0 0.0
    %399 = vmatpush1.msra.mxu0 %v115
    %400 = vmatprep.subr.mxu0 0.0
    %401 = vmatpush1.msra.mxu0 %v116
    %402 = vmatprep.subr.mxu0 0.0
    %403 = vmatpush1.msra.mxu0 %v117
    %404 = vmatprep.subr.mxu0 0.0
    %405 = vmatpush1.msra.mxu0 %v118
    %406 = vmatprep.mubr.f32.mxu0 %v192
    %407 = vmatmul.mubr.f32.gmra.mrb[0].mxu0 %v184
    %v408 = vpop.f32.mrb[0].mxu0
    %v409 = vadd.f32 %v339, %v408
    %v410 = vpop.f32.mrb[0].mxu0
    %411 = vdwg.mxu0
    %412 = vmatprep.subr.mxu0 0.0
    %413 = vmatpush1.msra.mxu0 %v119
    %414 = vmatprep.subr.mxu0 0.0
    %415 = vmatpush1.msra.mxu0 %v120
    %416 = vmatprep.subr.mxu0 0.0
    %417 = vmatpush1.msra.mxu0 %v121
    %418 = vmatprep.subr.mxu0 0.0
    %419 = vmatpush1.msra.mxu0 %v122
    %420 = vmatprep.subr.mxu0 0.0
    %421 = vmatpush1.msra.mxu0 %v123
    %422 = vmatprep.subr.mxu0 0.0
    %423 = vmatpush1.msra.mxu0 %v124
    %424 = vmatprep.subr.mxu0 0.0
    %425 = vmatpush1.msra.mxu0 %v125
    %426 = vmatprep.subr.mxu0 0.0
    %427 = vmatpush1.msra.mxu0 %v126
    %428 = vmatprep.subr.mxu0 0.0
    %429 = vmatpush1.msra.mxu0 %v127
    %430 = vmatprep.subr.mxu0 0.0
    %431 = vmatpush1.msra.mxu0 %v128
    %432 = vmatprep.subr.mxu0 0.0
    %433 = vmatpush1.msra.mxu0 %v129
    %434 = vmatprep.subr.mxu0 0.0
    %435 = vmatpush1.msra.mxu0 %v130
    %436 = vmatprep.subr.mxu0 0.0
    %437 = vmatpush1.msra.mxu0 %v131
    %438 = vmatprep.subr.mxu0 0.0
    %439 = vmatpush1.msra.mxu0 %v132
    %440 = vmatprep.subr.mxu0 0.0
    %441 = vmatpush1.msra.mxu0 %v133
    %442 = vmatprep.subr.mxu0 0.0
    %443 = vmatpush1.msra.mxu0 %v134
    %444 = vmatprep.subr.mxu0 0.0
    %445 = vmatpush1.msra.mxu0 %v135
    %446 = vmatprep.subr.mxu0 0.0
    %447 = vmatpush1.msra.mxu0 %v136
    %448 = vmatprep.subr.mxu0 0.0
    %449 = vmatpush1.msra.mxu0 %v137
    %450 = vmatprep.subr.mxu0 0.0
    %451 = vmatpush1.msra.mxu0 %v138
    %452 = vmatprep.subr.mxu0 0.0
    %453 = vmatpush1.msra.mxu0 %v139
    %454 = vmatprep.subr.mxu0 0.0
    %455 = vmatpush1.msra.mxu0 %v140
    %456 = vmatprep.subr.mxu0 0.0
    %457 = vmatpush1.msra.mxu0 %v141
    %458 = vmatprep.subr.mxu0 0.0
    %459 = vmatpush1.msra.mxu0 %v142
    %460 = vmatprep.subr.mxu0 0.0
    %461 = vmatpush1.msra.mxu0 %v143
    %462 = vmatprep.subr.mxu0 0.0
    %463 = vmatpush1.msra.mxu0 %v144
    %464 = vmatprep.subr.mxu0 0.0
    %465 = vmatpush1.msra.mxu0 %v145
    %466 = vmatprep.subr.mxu0 0.0
    %467 = vmatpush1.msra.mxu0 %v146
    %468 = vmatprep.subr.mxu0 0.0
    %469 = vmatpush1.msra.mxu0 %v147
    %470 = vmatprep.subr.mxu0 0.0
    %471 = vmatpush1.msra.mxu0 %v148
    %472 = vmatprep.subr.mxu0 0.0
    %473 = vmatpush1.msra.mxu0 %v149
    %474 = vmatprep.subr.mxu0 0.0
    %475 = vmatpush1.msra.mxu0 %v150
    %476 = vmatprep.mubr.f32.mxu0 %v193
    %477 = vmatmul.mubr.f32.gmra.mrb[0].mxu0 %v191
    %v478 = vpop.f32.mrb[0].mxu0
    %v479 = vadd.f32 %v409, %v478
    %v480 = vpop.f32.mrb[0].mxu0
    %481 = vdwg.mxu0
    %v482 = vmax.f32 %v479, 0.0
    %v483 = vld [vmem:[%s2] sm:$0xff]
    %v484 = vld [vmem:[%s2 + $0x8] sm:$0xff]
    %v485 = vld [vmem:[%s2 + $0x10] sm:$0xff]
    %v486 = vld [vmem:[%s2 + $0x18] sm:$0xff]
    %v487 = vld [vmem:[%s4 + $0x1] sm:$0x1]
    %v489 = vlaneseq
    %v490 = vshrl.u32 %v489, 7
    %v491 = vsub.s32 0, %v490
    %v492 = vrot.slane %v487, %v491
    %vm494 = vcmask 261120
    %v496 = vsel %vm494, %v482, 0
    %498 = vmatprep.subr.mxu0 0.0
    %499 = vmatpush1.msra.mxu0 %v483
    %500 = vmatprep.subr.mxu0 0.0
    %501 = vmatpush1.msra.mxu0 %v484
    %502 = vmatprep.subr.mxu0 0.0
    %503 = vmatpush1.msra.mxu0 %v485
    %504 = vmatprep.subr.mxu0 0.0
    %505 = vmatpush1.msra.mxu0 %v486
    %506 = vmatprep.subr.mxu0 0.0
    %507 = vmatpush1.msra.mxu0 0.0
    %508 = vmatprep.subr.mxu0 0.0
    %509 = vmatpush1.msra.mxu0 0.0
    %510 = vmatprep.subr.mxu0 0.0
    %511 = vmatpush1.msra.mxu0 0.0
    %512 = vmatprep.subr.mxu0 0.0
    %513 = vmatpush1.msra.mxu0 0.0
    %514 = vmatprep.subr.mxu0 0.0
    %515 = vmatpush1.msra.mxu0 0.0
    %516 = vmatprep.subr.mxu0 0.0
    %517 = vmatpush1.msra.mxu0 0.0
    %518 = vmatprep.subr.mxu0 0.0
    %519 = vmatpush1.msra.mxu0 0.0
    %520 = vmatprep.subr.mxu0 0.0
    %521 = vmatpush1.msra.mxu0 0.0
    %522 = vmatprep.subr.mxu0 0.0
    %523 = vmatpush1.msra.mxu0 0.0
    %524 = vmatprep.subr.mxu0 0.0
    %525 = vmatpush1.msra.mxu0 0.0
    %526 = vmatprep.subr.mxu0 0.0
    %527 = vmatpush1.msra.mxu0 0.0
    %528 = vmatprep.subr.mxu0 0.0
    %529 = vmatpush1.msra.mxu0 0.0
    %530 = vmatprep.subr.mxu0 0.0
    %531 = vmatpush1.msra.mxu0 0.0
    %532 = vmatprep.subr.mxu0 0.0
    %533 = vmatpush1.msra.mxu0 0.0
    %534 = vmatprep.subr.mxu0 0.0
    %535 = vmatpush1.msra.mxu0 0.0
    %536 = vmatprep.subr.mxu0 0.0
    %537 = vmatpush1.msra.mxu0 0.0
    %538 = vmatprep.subr.mxu0 0.0
    %539 = vmatpush1.msra.mxu0 0.0
    %540 = vmatprep.subr.mxu0 0.0
    %541 = vmatpush1.msra.mxu0 0.0
    %542 = vmatprep.subr.mxu0 0.0
    %543 = vmatpush1.msra.mxu0 0.0
    %544 = vmatprep.subr.mxu0 0.0
    %545 = vmatpush1.msra.mxu0 0.0
    %546 = vmatprep.subr.mxu0 0.0
    %547 = vmatpush1.msra.mxu0 0.0
    %548 = vmatprep.subr.mxu0 0.0
    %549 = vmatpush1.msra.mxu0 0.0
    %550 = vmatprep.subr.mxu0 0.0
    %551 = vmatpush1.msra.mxu0 0.0
    %552 = vmatprep.subr.mxu0 0.0
    %553 = vmatpush1.msra.mxu0 0.0
    %554 = vmatprep.subr.mxu0 0.0
    %555 = vmatpush1.msra.mxu0 0.0
    %556 = vmatprep.subr.mxu0 0.0
    %557 = vmatpush1.msra.mxu0 0.0
    %558 = vmatprep.subr.mxu0 0.0
    %559 = vmatpush1.msra.mxu0 0.0
    %560 = vmatprep.subr.mxu0 0.0
    %561 = vmatpush1.msra.mxu0 0.0
    %562 = vmatprep.mubr.f32.mxu0 0.0
    %563 = vmatmul.mubr.f32.gmra.mrb[0].mxu0 %v496
    %v564 = vpop.f32.mrb[0].mxu0
    %v565 = vadd.f32 %v492, %v564
    %v566 = vpop.f32.mrb[0].mxu0
    %567 = vdwg.mxu0
    %v568 = vmax.f32 %v565, 0.0
    %v569 = vld [vmem:[%s3] sm:$0xff]
    %v570 = vld [vmem:[%s3 + $0x8] sm:$0xff]
    %v571 = vld [vmem:[%s3 + $0x10] sm:$0xff]
    %v572 = vld [vmem:[%s3 + $0x18] sm:$0xff]
    %v573 = vld [vmem:[%s4 + $0x2] sm:$0x1]
    %v575 = vlaneseq
    %v576 = vshrl.u32 %v575, 7
    %v577 = vsub.s32 0, %v576
    %v578 = vrot.slane %v573, %v577
    %v581 = vsel %vm494, %v568, 0
    %583 = vmatprep.subr.mxu0 0.0
    %584 = vmatpush1.msra.mxu0 %v569
    %585 = vmatprep.subr.mxu0 0.0
    %586 = vmatpush1.msra.mxu0 %v570
    %587 = vmatprep.subr.mxu0 0.0
    %588 = vmatpush1.msra.mxu0 %v571
    %589 = vmatprep.subr.mxu0 0.0
    %590 = vmatpush1.msra.mxu0 %v572
    %591 = vmatprep.subr.mxu0 0.0
    %592 = vmatpush1.msra.mxu0 0.0
    %593 = vmatprep.subr.mxu0 0.0
    %594 = vmatpush1.msra.mxu0 0.0
    %595 = vmatprep.subr.mxu0 0.0
    %596 = vmatpush1.msra.mxu0 0.0
    %597 = vmatprep.subr.mxu0 0.0
    %598 = vmatpush1.msra.mxu0 0.0
    %599 = vmatprep.subr.mxu0 0.0
    %600 = vmatpush1.msra.mxu0 0.0
    %601 = vmatprep.subr.mxu0 0.0
    %602 = vmatpush1.msra.mxu0 0.0
    %603 = vmatprep.subr.mxu0 0.0
    %604 = vmatpush1.msra.mxu0 0.0
    %605 = vmatprep.subr.mxu0 0.0
    %606 = vmatpush1.msra.mxu0 0.0
    %607 = vmatprep.subr.mxu0 0.0
    %608 = vmatpush1.msra.mxu0 0.0
    %609 = vmatprep.subr.mxu0 0.0
    %610 = vmatpush1.msra.mxu0 0.0
    %611 = vmatprep.subr.mxu0 0.0
    %612 = vmatpush1.msra.mxu0 0.0
    %613 = vmatprep.subr.mxu0 0.0
    %614 = vmatpush1.msra.mxu0 0.0
    %615 = vmatprep.subr.mxu0 0.0
    %616 = vmatpush1.msra.mxu0 0.0
    %617 = vmatprep.subr.mxu0 0.0
    %618 = vmatpush1.msra.mxu0 0.0
    %619 = vmatprep.subr.mxu0 0.0
    %620 = vmatpush1.msra.mxu0 0.0
    %621 = vmatprep.subr.mxu0 0.0
    %622 = vmatpush1.msra.mxu0 0.0
    %623 = vmatprep.subr.mxu0 0.0
    %624 = vmatpush1.msra.mxu0 0.0
    %625 = vmatprep.subr.mxu0 0.0
    %626 = vmatpush1.msra.mxu0 0.0
    %627 = vmatprep.subr.mxu0 0.0
    %628 = vmatpush1.msra.mxu0 0.0
    %629 = vmatprep.subr.mxu0 0.0
    %630 = vmatpush1.msra.mxu0 0.0
    %631 = vmatprep.subr.mxu0 0.0
    %632 = vmatpush1.msra.mxu0 0.0
    %633 = vmatprep.subr.mxu0 0.0
    %634 = vmatpush1.msra.mxu0 0.0
    %635 = vmatprep.subr.mxu0 0.0
    %636 = vmatpush1.msra.mxu0 0.0
    %637 = vmatprep.subr.mxu0 0.0
    %638 = vmatpush1.msra.mxu0 0.0
    %639 = vmatprep.subr.mxu0 0.0
    %640 = vmatpush1.msra.mxu0 0.0
    %641 = vmatprep.subr.mxu0 0.0
    %642 = vmatpush1.msra.mxu0 0.0
    %643 = vmatprep.subr.mxu0 0.0
    %644 = vmatpush1.msra.mxu0 0.0
    %645 = vmatprep.subr.mxu0 0.0
    %646 = vmatpush1.msra.mxu0 0.0
    %647 = vmatprep.mubr.f32.mxu0 0.0
    %648 = vmatmul.mubr.f32.gmra.mrb[0].mxu0 %v581
    %v649 = vpop.f32.mrb[0].mxu0
    %v650 = vadd.f32 %v578, %v649
    %v651 = vpop.f32.mrb[0].mxu0
    %652 = vdwg.mxu0
    %v653 = vxor.u32 %v650, 2147483648
    %v654 = vmul.f32 %v653, 1.442695
    %v655 = vpow.pop %v654
    %v656 = vadd.f32 %v655, 1.0
    %v657 = vrcp.pop %v656
    %v658 = vmul.f32 1.0, %v657
    %vm659 = vcmask 74752
    %660 = vst.msk [vmem:[#allocation2] sm:$0x3] %vm659, %v658
    // Predicated region
    $region22: #{fused_mlp_forward.1} parent=1 // pred_check
      _
    $region23: #{fused_mlp_forward.1} parent=1 // pred_check_branch
      %662 = sbr.rel (0) target = $region25
    $region24: #{fused_mlp_forward.1} parent=1 // pred_region
      %s664 = ssub.s32 32, 32
      %665 = vsyncadd [#allocation3], %s664
      %s667 = sshll.u32 [#allocation2], 4
      %s668 = int_to_ptr.vmem [resolvable:$true] %s667
      %670 = dma.vmem_to_hbm [thread:$0]  %s668, 32, %s5, [#allocation3]
    $region25: #{fused_mlp_forward.1} parent=1 // pred_fallthru
      _
    // Predicated region
    $region26: #{fused_mlp_forward.1} parent=1 // pred_check
      _
    $region27: #{fused_mlp_forward.1} parent=1 // pred_check_branch
      %672 = sbr.rel (0) target = $region29
    $region28: #{fused_mlp_forward.1} parent=1 // pred_region
      %673 = dma.done [#allocation3], 32
    $region29: #{fused_mlp_forward.1} parent=1 // pred_fallthru
      _
    %674 = vsyncpa [#allocation3], 1

</llo_original>
